<compile_context>
chip_gen: v6e
topology: v6e:2x2x1
jax: 0.10.0
libtpu: 0.0.40
codegen_flags: <defaults>
</compile_context>

<pallas_src>
import functools

import jax
import jax.numpy as jnp
from jax.experimental import pallas as pl
from jax.experimental.pallas import tpu as pltpu


def _round_up(x, m):
    return (x + m - 1) // m * m


def _vmem_limit():
    """Generation-aware VMEM budget: ~48 MiB on v7x (64 MiB phys), ~96 MiB on v5e/v6e."""
    try:
        cap = int(pltpu.get_tpu_info().vmem_capacity_bytes)
    except Exception:
        cap = 64 * 1024 * 1024      # conservative (v7x-sized) fallback
    return (cap * 3) // 4


_VMEM_LIMIT = _vmem_limit()


def _plan_tiling(n):
    """Pick (n_pad, tm): destination-row tile of A, sized against the VMEM budget.

    Per grid step VMEM ~= 2*tm*n_pad   (int8 A tile, double-buffered)
                        + 2*tm*n_pad   (in-kernel bf16 copy of the A tile)
                        + 2*n_pad*128*2 (resident [h|1], lane-padded bf16, dbl-buffered)
                        + small weights / (tm, 20) output blocks.
    """
    n_pad = _round_up(max(n, 256), 256)
    if n_pad <= 1024:
        return n_pad, n_pad                       # single row tile for small graphs
    budget = int(_VMEM_LIMIT * 0.8)
    h_bytes = 2 * n_pad * 128 * 2
    avail = max(budget - h_bytes - (2 << 20), 4 * 256 * n_pad)
    tm = (avail // (4 * n_pad)) // 256 * 256
    tm = int(max(256, min(1024, tm)))
    # TODO(synk): for very large N (resident h alone near the budget) add a second
    # "arbitrary" grid axis over the contraction with an f32 VMEM accumulator.
    return _round_up(n_pad, tm), tm


# ---------------------------------------------------------------------------
# Kernel 1: one message-passing layer, tiled over destination rows of A.
#   h_aug = [h | 1]                               (cin_aug = cin + 1 columns)
#   m     = A_tile @ h_aug = [A h | deg]
#   out   = relu( h_tile_aug @ Wa + m @ Wb (+ residual) )
#   Wa = [W1a ; b1 | ones-col pick],  Wb = [W0@W1b ; b0@W1b | 0]   (packed slabs)
# ---------------------------------------------------------------------------
def mp_layer_kernel(a_ref, h_ref, w_ref, o_ref, *, cin_aug, tm, residual):
    i = pl.program_id(0)
    a = a_ref[...].astype(jnp.bfloat16)                 # [TM, N] int8 -> bf16 (exact)
    h_full = h_ref[...]                                 # [N, cin_aug] bf16, resident
    row0 = pl.multiple_of(i * tm, tm)
    h_tile = h_ref[pl.ds(row0, tm), :]                  # [TM, cin_aug] destination rows

    # Big matmul on the bf16 MXU path, f32 accumulation.
    m = jnp.dot(a, h_full, preferred_element_type=jnp.float32)   # [TM, cin_aug]

    wa = w_ref[0:cin_aug, :]                            # [cin_aug, 20]
    wb = w_ref[cin_aug:2 * cin_aug, :]                  # [cin_aug, 20]
    out = (jnp.dot(h_tile, wa, preferred_element_type=jnp.float32)
           + jnp.dot(m.astype(jnp.bfloat16), wb, preferred_element_type=jnp.float32))
    if residual:
        out = out + h_tile.astype(jnp.float32)
    o_ref[...] = jnp.maximum(out, 0.0).astype(o_ref.dtype)


def _mp_layer(a_i8, h, w_slab, *, cin_aug, cout_aug, residual, tm, out_dtype):
    n_pad = a_i8.shape[0]
    grid = (n_pad // tm,)
    kernel = functools.partial(mp_layer_kernel, cin_aug=cin_aug, tm=tm, residual=residual)
    flops = 2 * n_pad * n_pad * cin_aug + 2 * 2 * n_pad * cin_aug * cout_aug
    bytes_accessed = (a_i8.size + h.size * h.dtype.itemsize + w_slab.size * 2
                      + n_pad * cout_aug * jnp.dtype(out_dtype).itemsize)
    return pl.pallas_call(
        kernel,
        out_shape=jax.ShapeDtypeStruct((n_pad, cout_aug), out_dtype),
        grid_spec=pltpu.PrefetchScalarGridSpec(
            num_scalar_prefetch=0,
            grid=grid,
            in_specs=[
                pl.BlockSpec((tm, n_pad), lambda i: (i, 0)),        # int8 A row tile (streamed)
                pl.BlockSpec((n_pad, cin_aug), lambda i: (0, 0)),   # full [h|1] (resident)
                pl.BlockSpec(w_slab.shape, lambda i: (0, 0)),       # packed layer weights
            ],
            out_specs=pl.BlockSpec((tm, cout_aug), lambda i: (i, 0)),
        ),
        compiler_params=pltpu.CompilerParams(
            dimension_semantics=("parallel",),
            vmem_limit_bytes=_VMEM_LIMIT,
        ),
        cost_estimate=pl.CostEstimate(
            flops=int(flops), transcendentals=0, bytes_accessed=int(bytes_accessed)),
    )(a_i8, h, w_slab)


# ---------------------------------------------------------------------------
# Kernel 2: virtual-node readout.  h stays in HBM; only the G selected rows are
# DMA-gathered (indices scalar-prefetched into SMEM), then the 2-layer MLP runs.
# The gathered rows carry the ones column, so fc_0's bias rides in the slab.
# ---------------------------------------------------------------------------
def readout_kernel(idx_ref, h_hbm, w_ref, out_ref, gbuf, sems, *, n_graphs):
    for g in range(n_graphs):
        pltpu.make_async_copy(h_hbm.at[pl.ds(idx_ref[g], 1), :],
                              gbuf.at[pl.ds(g, 1), :], sems.at[g]).start()
    for g in range(n_graphs):
        pltpu.make_async_copy(h_hbm.at[pl.ds(idx_ref[g], 1), :],
                              gbuf.at[pl.ds(g, 1), :], sems.at[g]).wait()

    gv = gbuf[...]                                   # [G, 20] f32 (col 19 is the ones col)
    w0b0 = w_ref[0:20, :]                            # [20, 10]: rows 0..18 Wfc0, row 19 bfc0
    z = jnp.maximum(jnp.dot(gv, w0b0, preferred_element_type=jnp.float32), 0.0)
    w1 = w_ref[20:30, 0:1]                           # [10, 1]
    b1 = w_ref[30:31, 0:1]                           # [1, 1]
    out_ref[...] = jnp.maximum(
        jnp.dot(z, w1, preferred_element_type=jnp.float32) + b1, 0.0)


def _readout(last_idx, h, w_slab, *, n_graphs):
    hidden_aug = h.shape[1]
    return pl.pallas_call(
        functools.partial(readout_kernel, n_graphs=n_graphs),
        out_shape=jax.ShapeDtypeStruct((n_graphs, 1), jnp.float32),
        grid_spec=pltpu.PrefetchScalarGridSpec(
            num_scalar_prefetch=1,
            grid=(1,),
            in_specs=[
                pl.BlockSpec(memory_space=pl.ANY),                  # h stays in HBM
                pl.BlockSpec(w_slab.shape, lambda i, idx: (0, 0)),  # readout slab
            ],
            out_specs=pl.BlockSpec((n_graphs, 1), lambda i, idx: (0, 0)),
            scratch_shapes=[
                pltpu.VMEM((n_graphs, hidden_aug), jnp.float32),    # gathered rows
                pltpu.SemaphoreType.DMA((n_graphs,)),
            ],
        ),
        compiler_params=pltpu.CompilerParams(
            dimension_semantics=("arbitrary",),
            vmem_limit_bytes=_VMEM_LIMIT,
        ),
    )(last_idx, h, w_slab)


# ---------------------------------------------------------------------------
# Parameter init (torch Linear layout: W stored [in, out]) and slab packing.
# ---------------------------------------------------------------------------
def init_params(key):
    params = {}

    def lin(key, fan_in, fan_out):
        kw, kb = jax.random.split(key)
        bound = float(fan_in) ** -0.5
        w = jax.random.uniform(kw, (fan_in, fan_out), jnp.float32, -bound, bound)
        b = jax.random.uniform(kb, (1, fan_out), jnp.float32, -bound, bound)
        return w, b

    keys = jax.random.split(key, 5)
    layer_dims = [(11, 19), (19, 19), (19, 19)]
    for idx, (cin, cout) in enumerate(layer_dims, start=1):
        k0, k1 = jax.random.split(keys[idx - 1])
        params[f"w0_{idx}"], params[f"b0_{idx}"] = lin(k0, cin, cout)            # fc_0
        params[f"w1_{idx}"], params[f"b1_{idx}"] = lin(k1, cin + cout, cout)     # fc_1
    params["wfc0"], params["bfc0"] = lin(keys[3], 19, 10)
    params["wfc1"], params["bfc1"] = lin(keys[4], 10, 1)
    return params


def pack_params(params):
    """Fold W0@W1b / b0@W1b / biases / ones-column into per-layer bf16 slabs."""
    slabs = {}
    cout, cout_aug = 19, 20
    for i, cin in ((1, 11), (2, 19), (3, 19)):
        cin_aug = cin + 1
        w0, b0 = params[f"w0_{i}"], params[f"b0_{i}"]
        w1, b1 = params[f"w1_{i}"], params[f"b1_{i}"]
        w1a, w1b = w1[:cin], w1[cin:]
        wm = w0 @ w1b                       # (A h W0) W1b == (A h)(W0 W1b)
        bm = b0 @ w1b                       # (A 1 b0) W1b == deg * (b0 W1b)

        wa = jnp.zeros((cin_aug, cout_aug), jnp.float32)
        wa = wa.at[:cin, :cout].set(w1a).at[cin, :cout].set(b1[0])
        if i == 1:                           # layer 1 (no residual): propagate ones column
            wa = wa.at[cin, cout].set(1.0)   # layers 2/3: residual supplies the ones column
        wb = jnp.zeros((cin_aug, cout_aug), jnp.float32)
        wb = wb.at[:cin, :cout].set(wm).at[cin, :cout].set(bm[0])
        slabs[f"layer_{i}"] = jnp.concatenate([wa, wb], axis=0).astype(jnp.bfloat16)

    r = jnp.zeros((31, 10), jnp.float32)
    r = r.at[0:19, :].set(params["wfc0"]).at[19, :].set(params["bfc0"][0])
    r = r.at[20:30, 0:1].set(params["wfc1"]).at[30:31, 0:1].set(params["bfc1"])
    slabs["readout"] = r
    return slabs


# ---------------------------------------------------------------------------
# Forward wrapper.
# ---------------------------------------------------------------------------
def dipolenet_forward(x, edge_index, last_idx, params):
    n = x.shape[0]
    n_graphs = last_idx.shape[0]
    n_pad, tm = _plan_tiling(n)

    # Padded adjacency built directly in the streaming dtype (int8; edge
    # multiplicities must be <= 127, exact).  Padded nodes have zero rows /
    # columns and are never gathered, so they cannot affect outputs.
    src = edge_index[0].astype(jnp.int32)
    dst = edge_index[1].astype(jnp.int32)
    a_i8 = jnp.zeros((n_pad, n_pad), jnp.int8).at[dst, src].add(1)

    # bf16 activations with an appended ones column (degree / bias folding).
    x_aug = jnp.zeros((n_pad, 12), jnp.bfloat16)
    x_aug = x_aug.at[:n, :11].set(x.astype(jnp.bfloat16)).at[:, 11].set(1.0)

    slabs = pack_params(params)

    h = _mp_layer(a_i8, x_aug, slabs["layer_1"], cin_aug=12, cout_aug=20,
                  residual=False, tm=tm, out_dtype=jnp.bfloat16)
    h = _mp_layer(a_i8, h, slabs["layer_2"], cin_aug=20, cout_aug=20,
                  residual=True, tm=tm, out_dtype=jnp.bfloat16)
    h = _mp_layer(a_i8, h, slabs["layer_3"], cin_aug=20, cout_aug=20,
                  residual=True, tm=tm, out_dtype=jnp.float32)   # f32 rows for the gather
    return _readout(last_idx.astype(jnp.int32), h, slabs["readout"], n_graphs=n_graphs)


# ---------------------------------------------------------------------------
# Pure-JAX f32 reference (unfolded math) for the correctness check.
# ---------------------------------------------------------------------------
def reference_forward(x, edge_index, last_idx, params):
    n = x.shape[0]
    src, dst = edge_index[0], edge_index[1]
    adj = jnp.zeros((n, n), jnp.float32).at[dst, src].add(1.0)

    def mp(h, i):
        h0 = h @ params[f"w0_{i}"] + params[f"b0_{i}"]
        h1 = adj @ h0
        cat = jnp.concatenate([h, h1], axis=-1)
        return cat @ params[f"w1_{i}"] + params[f"b1_{i}"]

    h = jax.nn.relu(mp(x, 1))
    h = jax.nn.relu(mp(h, 2) + h)
    h = jax.nn.relu(mp(h, 3) + h)
    g = h[last_idx]
    g = jax.nn.relu(g @ params["wfc0"] + params["bfc0"])
    return jax.nn.relu(g @ params["wfc1"] + params["bfc1"])


if __name__ == "__main__":
    key = jax.random.PRNGKey(0)
    k_x, k_src, k_dst, k_par = jax.random.split(key, 4)

    # Small synthetic graph batch: N nodes, E edges, G graphs.
    N, E, G = 16, 32, 2
    x = jax.random.normal(k_x, (N, 11), jnp.float32)
    src = jax.random.randint(k_src, (E,), 0, N)
    dst = jax.random.randint(k_dst, (E,), 0, N)
    edge_index = jnp.stack([src, dst]).astype(jnp.int32)               # [2, E]
    batch = jnp.concatenate(
        [jnp.zeros(N // 2, jnp.int32), jnp.ones(N - N // 2, jnp.int32)])

    # get_virtual_node_position: cumulative bincount - 1 -> last node of each graph.
    counts = jnp.bincount(batch, length=G)
    last_idx = (jnp.cumsum(counts) - 1).astype(jnp.int32)

    # int8 adjacency storage is exact only for multiplicities <= 127.
    mult = jnp.zeros((N, N), jnp.int32).at[edge_index[1], edge_index[0]].add(1)
    assert int(jnp.max(mult)) <= 127

    params = init_params(k_par)

    out = jax.block_until_ready(dipolenet_forward(x, edge_index, last_idx, params))
    ref = reference_forward(x, edge_index, last_idx, params)

    assert out.shape == (G, 1)
    # bf16 activations / weights vs. f32 reference -> loosened tolerance.
    assert jnp.allclose(out, ref, atol=5e-2, rtol=5e-2), (out, ref)

    print("KERNEL_OK")
</pallas_src>

<mosaic_0001>
module attributes {stable_mosaic.version = 11 : i64} {
  func.func @mp_layer_kernel(%arg0: i32, %arg1: memref<256x256xi8, #tpu.memory_space<vmem>>, %arg2: memref<256x12xbf16, #tpu.memory_space<vmem>>, %arg3: memref<24x20xbf16, #tpu.memory_space<vmem>>, %arg4: memref<256x20xbf16, #tpu.memory_space<vmem>>) attributes {dimension_semantics = [#tpu.dimension_semantics<parallel>], iteration_bounds = array<i64: 1>, scalar_prefetch = 0 : i64, scratch_operands = 0 : i64, tpu.core_type = #tpu.core_type<tc>, window_params = [{transform_indices = @transform_0, window_bounds = array<i64: 256, 256>}, {pipeline_mode = #tpu.pipeline_mode<synchronous>, transform_indices = @transform_1, window_bounds = array<i64: 256, 12>}, {pipeline_mode = #tpu.pipeline_mode<synchronous>, transform_indices = @transform_2, window_bounds = array<i64: 24, 20>}, {transform_indices = @transform_3, window_bounds = array<i64: 256, 20>}]} {
    %c0 = arith.constant 0 : index
    %c0_0 = arith.constant 0 : index
    %0 = vector.load %arg1[%c0, %c0_0] : memref<256x256xi8, #tpu.memory_space<vmem>>, vector<256x256xi8>
    %1 = arith.sitofp %0 : vector<256x256xi8> to vector<256x256xbf16>
    %c0_1 = arith.constant 0 : index
    %c0_2 = arith.constant 0 : index
    %2 = vector.load %arg2[%c0_1, %c0_2] : memref<256x12xbf16, #tpu.memory_space<vmem>>, vector<256x12xbf16>
    %c256_i32 = arith.constant 256 : i32
    %3 = arith.muli %arg0, %c256_i32 : i32
    %4 = tpu.assume_multiple %3, 256 : i32
    %5 = arith.index_cast %4 : i32 to index
    %c0_3 = arith.constant 0 : index
    %6 = vector.load %arg2[%5, %c0_3] : memref<256x12xbf16, #tpu.memory_space<vmem>>, vector<256x12xbf16>
    %cst = arith.constant dense<0.000000e+00> : vector<256x12xf32>
    %7 = tpu.matmul %1, %2, %cst {dimension_numbers = #tpu.dot_dimension_numbers<[1], [0], [0], [1], [0, 0, 1, 1], [], []>} : vector<256x256xbf16>, vector<256x12xbf16>, vector<256x12xf32> -> vector<256x12xf32>
    %c0_4 = arith.constant 0 : index
    %c0_5 = arith.constant 0 : index
    %8 = vector.load %arg3[%c0_4, %c0_5] : memref<24x20xbf16, #tpu.memory_space<vmem>>, vector<12x20xbf16>
    %c12 = arith.constant 12 : index
    %c0_6 = arith.constant 0 : index
    %9 = vector.load %arg3[%c12, %c0_6] : memref<24x20xbf16, #tpu.memory_space<vmem>>, vector<12x20xbf16>
    %cst_7 = arith.constant dense<0.000000e+00> : vector<256x20xf32>
    %10 = tpu.matmul %6, %8, %cst_7 {dimension_numbers = #tpu.dot_dimension_numbers<[1], [0], [0], [1], [0, 0, 1, 1], [], []>} : vector<256x12xbf16>, vector<12x20xbf16>, vector<256x20xf32> -> vector<256x20xf32>
    %11 = arith.truncf %7 : vector<256x12xf32> to vector<256x12xbf16>
    %cst_8 = arith.constant dense<0.000000e+00> : vector<256x20xf32>
    %12 = tpu.matmul %11, %9, %cst_8 {dimension_numbers = #tpu.dot_dimension_numbers<[1], [0], [0], [1], [0, 0, 1, 1], [], []>} : vector<256x12xbf16>, vector<12x20xbf16>, vector<256x20xf32> -> vector<256x20xf32>
    %13 = arith.addf %10, %12 : vector<256x20xf32>
    %cst_9 = arith.constant 0.000000e+00 : f32
    %14 = vector.broadcast %cst_9 : f32 to vector<256x20xf32>
    %15 = arith.maximumf %13, %14 : vector<256x20xf32>
    %16 = arith.truncf %15 : vector<256x20xf32> to vector<256x20xbf16>
    %c0_10 = arith.constant 0 : index
    %c0_11 = arith.constant 0 : index
    %17 = vector.load %arg4[%c0_10, %c0_11] : memref<256x20xbf16, #tpu.memory_space<vmem>>, vector<256x20xbf16>
    tpu.vector_store %arg4[%c0_10, %c0_11], %16 {strides = array<i32>} : memref<256x20xbf16, #tpu.memory_space<vmem>>, vector<256x20xbf16>,
    return
  }
  func.func @transform_0(%arg0: i32) -> (i32, i32) {
    %c0_i32 = arith.constant 0 : i32
    %c0_i32_0 = arith.constant 0 : i32
    return %arg0, %c0_i32 : i32, i32
  }
  func.func @transform_1(%arg0: i32) -> (i32, i32) {
    %c0_i32 = arith.constant 0 : i32
    %c0_i32_0 = arith.constant 0 : i32
    %c0_i32_1 = arith.constant 0 : i32
    return %c0_i32, %c0_i32_0 : i32, i32
  }
  func.func @transform_2(%arg0: i32) -> (i32, i32) {
    %c0_i32 = arith.constant 0 : i32
    %c0_i32_0 = arith.constant 0 : i32
    %c0_i32_1 = arith.constant 0 : i32
    return %c0_i32, %c0_i32_0 : i32, i32
  }
  func.func @transform_3(%arg0: i32) -> (i32, i32) {
    %c0_i32 = arith.constant 0 : i32
    %c0_i32_0 = arith.constant 0 : i32
    return %arg0, %c0_i32 : i32, i32
  }
}

</mosaic_0001>

<llo_original>
// kernel: tpu_custom_call.1
$region0: #{tpu_custom_call.1}
  #allocation0 [shape = 'u32[]', space=smem, size = 0x4, offset = 0x4, fixed_abs, tag = 'smem constant byte address 0x4 - core index']
  #allocation1 [shape = 'u32[144,128]{1,0:T(1,128)}', space=vmem, size = 0x12000, scoped, tag = 'internal scratch']
  %s0 = inlined_call_operand.vmem [shape: s8[256,256], index: 0, kind: input, shape index: {}]
  %s1 = inlined_call_operand.vmem [shape: bf16[256,12], index: 1, kind: input, shape index: {}]
  %s2 = inlined_call_operand.vmem [shape: bf16[24,20], index: 2, kind: input, shape index: {}]
  %s3 = inlined_call_operand.vmem [shape: bf16[256,20], index: 3, kind: output, shape index: {}]
  %s4 = sld [smem:[#allocation0]]
  $region22: #{tpu_custom_call.1} parent=0
    _
  %s6 = ssub.s32 1, %s4
  %s7 = scalar_select 0, %s6, %s4
  // Predicated region
  $region2: #{tpu_custom_call.1} parent=0 // pred_check
    _
  $region3: #{tpu_custom_call.1} parent=0 // pred_check_branch
    %9 = sbr.rel (0) target = $region5
  $region4: #{tpu_custom_call.1} parent=0 // pred_region
    _
  $region5: #{tpu_custom_call.1} parent=0 // pred_fallthru
    _
  // Predicated region
  $region6: #{tpu_custom_call.1} parent=0 // pred_check
    _
  $region7: #{tpu_custom_call.1} parent=0 // pred_check_branch
    %11 = sbr.rel (0) target = $region9
  $region8: #{tpu_custom_call.1} parent=0 // pred_region
    _
  $region9: #{tpu_custom_call.1} parent=0 // pred_fallthru
    _
  // Predicated region
  $region10: #{tpu_custom_call.1} parent=0 // pred_check
    _
  $region11: #{tpu_custom_call.1} parent=0 // pred_check_branch
    %13 = sbr.rel (0) target = $region13
  $region12: #{tpu_custom_call.1} parent=0 // pred_region
    _
  $region13: #{tpu_custom_call.1} parent=0 // pred_fallthru
    _
  %v15 = vld [vmem:[%s0] sm:$0xff]
  %v16 = vld [vmem:[%s0 + $0x8] sm:$0xff]
  %v17 = vld [vmem:[%s0 + $0x10] sm:$0xff]
  %v18 = vld [vmem:[%s0 + $0x18] sm:$0xff]
  %v19 = vld [vmem:[%s0 + $0x20] sm:$0xff]
  %v20 = vld [vmem:[%s0 + $0x28] sm:$0xff]
  %v21 = vld [vmem:[%s0 + $0x30] sm:$0xff]
  %v22 = vld [vmem:[%s0 + $0x38] sm:$0xff]
  %v23 = vld [vmem:[%s0 + $0x40] sm:$0xff]
  %v24 = vld [vmem:[%s0 + $0x48] sm:$0xff]
  %v25 = vld [vmem:[%s0 + $0x50] sm:$0xff]
  %v26 = vld [vmem:[%s0 + $0x58] sm:$0xff]
  %v27 = vld [vmem:[%s0 + $0x60] sm:$0xff]
  %v28 = vld [vmem:[%s0 + $0x68] sm:$0xff]
  %v29 = vld [vmem:[%s0 + $0x70] sm:$0xff]
  %v30 = vld [vmem:[%s0 + $0x78] sm:$0xff]
  %v31 = vunpack.c.l.s8.bf16 %v15
  %v32 = vunpack.c.l.s8.bf16 %v16
  %v33 = vunpack.c.h.s8.bf16 %v15
  %v34 = vunpack.c.h.s8.bf16 %v16
  %v35 = vunpack.c.l.s8.bf16 %v17
  %v36 = vunpack.c.l.s8.bf16 %v18
  %v37 = vunpack.c.h.s8.bf16 %v17
  %v38 = vunpack.c.h.s8.bf16 %v18
  %v39 = vunpack.c.l.s8.bf16 %v19
  %v40 = vunpack.c.l.s8.bf16 %v20
  %v41 = vunpack.c.h.s8.bf16 %v19
  %v42 = vunpack.c.h.s8.bf16 %v20
  %v43 = vunpack.c.l.s8.bf16 %v21
  %v44 = vunpack.c.l.s8.bf16 %v22
  %v45 = vunpack.c.h.s8.bf16 %v21
  %v46 = vunpack.c.h.s8.bf16 %v22
  %v47 = vunpack.c.l.s8.bf16 %v23
  %v48 = vunpack.c.l.s8.bf16 %v24
  %v49 = vunpack.c.h.s8.bf16 %v23
  %v50 = vunpack.c.h.s8.bf16 %v24
  %v51 = vunpack.c.l.s8.bf16 %v25
  %v52 = vunpack.c.l.s8.bf16 %v26
  %v53 = vunpack.c.h.s8.bf16 %v25
  %v54 = vunpack.c.h.s8.bf16 %v26
  %v55 = vunpack.c.l.s8.bf16 %v27
  %v56 = vunpack.c.l.s8.bf16 %v28
  %v57 = vunpack.c.h.s8.bf16 %v27
  %v58 = vunpack.c.h.s8.bf16 %v28
  %v59 = vunpack.c.l.s8.bf16 %v29
  %v60 = vunpack.c.l.s8.bf16 %v30
  %v61 = vunpack.c.h.s8.bf16 %v29
  %v62 = vunpack.c.h.s8.bf16 %v30
  %v63 = vld [vmem:[%s1] sm:$0xf]
  %v64 = vld [vmem:[%s1 + $0x4] sm:$0xf]
  %v65 = vld [vmem:[%s1 + $0x8] sm:$0xf]
  %v66 = vld [vmem:[%s1 + $0xc] sm:$0xf]
  %v67 = vld [vmem:[%s1 + $0x10] sm:$0xf]
  %v68 = vld [vmem:[%s1 + $0x14] sm:$0xf]
  %v69 = vld [vmem:[%s1 + $0x18] sm:$0xf]
  %v70 = vld [vmem:[%s1 + $0x1c] sm:$0xf]
  %v71 = vld [vmem:[%s1 + $0x20] sm:$0xf]
  %v72 = vld [vmem:[%s1 + $0x24] sm:$0xf]
  %v73 = vld [vmem:[%s1 + $0x28] sm:$0xf]
  %v74 = vld [vmem:[%s1 + $0x2c] sm:$0xf]
  %v75 = vld [vmem:[%s1 + $0x30] sm:$0xf]
  %v76 = vld [vmem:[%s1 + $0x34] sm:$0xf]
  %v77 = vld [vmem:[%s1 + $0x38] sm:$0xf]
  %v78 = vld [vmem:[%s1 + $0x3c] sm:$0xf]
  %v79 = vld [vmem:[%s1 + $0x40] sm:$0xf]
  %v80 = vld [vmem:[%s1 + $0x44] sm:$0xf]
  %v81 = vld [vmem:[%s1 + $0x48] sm:$0xf]
  %v82 = vld [vmem:[%s1 + $0x4c] sm:$0xf]
  %v83 = vld [vmem:[%s1 + $0x50] sm:$0xf]
  %v84 = vld [vmem:[%s1 + $0x54] sm:$0xf]
  %v85 = vld [vmem:[%s1 + $0x58] sm:$0xf]
  %v86 = vld [vmem:[%s1 + $0x5c] sm:$0xf]
  %v87 = vld [vmem:[%s1 + $0x60] sm:$0xf]
  %v88 = vld [vmem:[%s1 + $0x64] sm:$0xf]
  %v89 = vld [vmem:[%s1 + $0x68] sm:$0xf]
  %v90 = vld [vmem:[%s1 + $0x6c] sm:$0xf]
  %v91 = vld [vmem:[%s1 + $0x70] sm:$0xf]
  %v92 = vld [vmem:[%s1 + $0x74] sm:$0xf]
  %v93 = vld [vmem:[%s1 + $0x78] sm:$0xf]
  %v94 = vld [vmem:[%s1 + $0x7c] sm:$0xf]
  %s95 = smul.u32 0, 256
  %s96 = sshra.s32 %s95, 3
  %s97 = sand.u32 %s95, 7
  %s98 = smul.addr %s96, 4
  %s99 = scalar_lea.vmem %s1, %s98
  %v100 = vld [vmem:[%s99] sm:$0xf]
  %v101 = vld [vmem:[%s99 + $0x4] sm:$0xf]
  %v102 = vld [vmem:[%s99 + $0x8] sm:$0xf]
  %v103 = vld [vmem:[%s99 + $0xc] sm:$0xf]
  %v104 = vld [vmem:[%s99 + $0x10] sm:$0xf]
  %v105 = vld [vmem:[%s99 + $0x14] sm:$0xf]
  %v106 = vld [vmem:[%s99 + $0x18] sm:$0xf]
  %v107 = vld [vmem:[%s99 + $0x1c] sm:$0xf]
  %v108 = vld [vmem:[%s99 + $0x20] sm:$0xf]
  %v109 = vld [vmem:[%s99 + $0x24] sm:$0xf]
  %v110 = vld [vmem:[%s99 + $0x28] sm:$0xf]
  %v111 = vld [vmem:[%s99 + $0x2c] sm:$0xf]
  %v112 = vld [vmem:[%s99 + $0x30] sm:$0xf]
  %v113 = vld [vmem:[%s99 + $0x34] sm:$0xf]
  %v114 = vld [vmem:[%s99 + $0x38] sm:$0xf]
  %v115 = vld [vmem:[%s99 + $0x3c] sm:$0xf]
  %v116 = vld [vmem:[%s99 + $0x40] sm:$0xf]
  %v117 = vld [vmem:[%s99 + $0x44] sm:$0xf]
  %v118 = vld [vmem:[%s99 + $0x48] sm:$0xf]
  %v119 = vld [vmem:[%s99 + $0x4c] sm:$0xf]
  %v120 = vld [vmem:[%s99 + $0x50] sm:$0xf]
  %v121 = vld [vmem:[%s99 + $0x54] sm:$0xf]
  %v122 = vld [vmem:[%s99 + $0x58] sm:$0xf]
  %v123 = vld [vmem:[%s99 + $0x5c] sm:$0xf]
  %v124 = vld [vmem:[%s99 + $0x60] sm:$0xf]
  %v125 = vld [vmem:[%s99 + $0x64] sm:$0xf]
  %v126 = vld [vmem:[%s99 + $0x68] sm:$0xf]
  %v127 = vld [vmem:[%s99 + $0x6c] sm:$0xf]
  %v128 = vld [vmem:[%s99 + $0x70] sm:$0xf]
  %v129 = vld [vmem:[%s99 + $0x74] sm:$0xf]
  %v130 = vld [vmem:[%s99 + $0x78] sm:$0xf]
  %v131 = vld [vmem:[%s99 + $0x7c] sm:$0xf]
  %v164 = vunpack.c.l.b16 %v63
  %v165 = vunpack.c.l.b16 %v64
  %v166 = vunpack.c.l.b16 %v65
  %v167 = vunpack.c.l.b16 %v66
  %v168 = vunpack.c.l.b16 %v67
  %v169 = vunpack.c.l.b16 %v68
  %v170 = vunpack.c.l.b16 %v69
  %v171 = vunpack.c.l.b16 %v70
  %v172 = vunpack.c.l.b16 %v71
  %v173 = vunpack.c.l.b16 %v72
  %v174 = vunpack.c.l.b16 %v73
  %v175 = vunpack.c.l.b16 %v74
  %v176 = vunpack.c.l.b16 %v75
  %v177 = vunpack.c.l.b16 %v76
  %v178 = vunpack.c.l.b16 %v77
  %v179 = vunpack.c.l.b16 %v78
  %v180 = vunpack.c.l.b16 %v79
  %v181 = vunpack.c.l.b16 %v80
  %v182 = vunpack.c.l.b16 %v81
  %v183 = vunpack.c.l.b16 %v82
  %v184 = vunpack.c.l.b16 %v83
  %v185 = vunpack.c.l.b16 %v84
  %v186 = vunpack.c.l.b16 %v85
  %v187 = vunpack.c.l.b16 %v86
  %v188 = vunpack.c.l.b16 %v87
  %v189 = vunpack.c.l.b16 %v88
  %v190 = vunpack.c.l.b16 %v89
  %v191 = vunpack.c.l.b16 %v90
  %v192 = vunpack.c.l.b16 %v91
  %v193 = vunpack.c.l.b16 %v92
  %v194 = vunpack.c.l.b16 %v93
  %v195 = vunpack.c.l.b16 %v94
  %v196 = vpack.c.b16 %v165, %v164
  %v197 = vpack.c.b16 %v167, %v166
  %v198 = vpack.c.b16 %v169, %v168
  %v199 = vpack.c.b16 %v171, %v170
  %v200 = vpack.c.b16 %v173, %v172
  %v201 = vpack.c.b16 %v175, %v174
  %v202 = vpack.c.b16 %v177, %v176
  %v203 = vpack.c.b16 %v179, %v178
  %v204 = vpack.c.b16 %v181, %v180
  %v205 = vpack.c.b16 %v183, %v182
  %v206 = vpack.c.b16 %v185, %v184
  %v207 = vpack.c.b16 %v187, %v186
  %v208 = vpack.c.b16 %v189, %v188
  %v209 = vpack.c.b16 %v191, %v190
  %v210 = vpack.c.b16 %v193, %v192
  %v211 = vpack.c.b16 %v195, %v194
  %228 = vmatprep.subr.bf16.mxu0 0
  %229 = vmatpush1.bf16.msra.mxu0 %v203
  %230 = vmatprep.subr.bf16.mxu0 0
  %231 = vmatpush1.bf16.msra.mxu0 %v202
  %232 = vmatprep.subr.bf16.mxu0 0
  %233 = vmatpush1.bf16.msra.mxu0 %v201
  %234 = vmatprep.subr.bf16.mxu0 0
  %235 = vmatpush1.bf16.msra.mxu0 %v200
  %236 = vmatprep.subr.bf16.mxu0 0
  %237 = vmatpush1.bf16.msra.mxu0 %v199
  %238 = vmatprep.subr.bf16.mxu0 0
  %239 = vmatpush1.bf16.msra.mxu0 %v198
  %240 = vmatprep.subr.bf16.mxu0 0
  %241 = vmatpush1.bf16.msra.mxu0 %v197
  %242 = vmatprep.subr.bf16.mxu0 0
  %243 = vmatpush1.bf16.msra.mxu0 %v196
  %244 = vmatprep.subr.bf16.mxu0 0
  %245 = vmatpush2.bf16.msra.mxu0 %v211
  %246 = vmatprep.subr.bf16.mxu0 0
  %247 = vmatpush2.bf16.msra.mxu0 %v210
  %248 = vmatprep.subr.bf16.mxu0 0
  %249 = vmatpush2.bf16.msra.mxu0 %v209
  %250 = vmatprep.subr.bf16.mxu0 0
  %251 = vmatpush2.bf16.msra.mxu0 %v208
  %252 = vmatprep.subr.bf16.mxu0 0
  %253 = vmatpush2.bf16.msra.mxu0 %v207
  %254 = vmatprep.subr.bf16.mxu0 0
  %255 = vmatpush2.bf16.msra.mxu0 %v206
  %256 = vmatprep.subr.bf16.mxu0 0
  %257 = vmatpush2.bf16.msra.mxu0 %v205
  %258 = vmatprep.subr.bf16.mxu0 0
  %259 = vmatpush2.bf16.msra.mxu0 %v204
  %260 = vmatprep.mubr.bf16.mxu0 %v32
  %261 = vmatmul.mubr.bf16.gmra.mxu0 %v31
  %v262 = vpop.f32.mrf.mxu0
  %v263 = vadd.f32 0.0, %v262
  %v264 = vpop.f32.mrf.mxu0
  %v265 = vpop.f32.mrf.mxu0
  %v266 = vadd.f32 0.0, %v265
  %v267 = vpop.f32.mrf.mxu0
  %268 = vmatprep.mubr.bf16.mxu0 %v34
  %269 = vmatmul.mubr.bf16.gmra.mxu0 %v33
  %v270 = vpop.f32.mrf.mxu0
  %v271 = vadd.f32 0.0, %v270
  %v272 = vpop.f32.mrf.mxu0
  %v273 = vpop.f32.mrf.mxu0
  %v274 = vadd.f32 0.0, %v273
  %v275 = vpop.f32.mrf.mxu0
  %276 = vmatprep.mubr.bf16.mxu0 %v36
  %277 = vmatmul.mubr.bf16.gmra.mxu0 %v35
  %v278 = vpop.f32.mrf.mxu0
  %v279 = vadd.f32 0.0, %v278
  %v280 = vpop.f32.mrf.mxu0
  %v281 = vpop.f32.mrf.mxu0
  %v282 = vadd.f32 0.0, %v281
  %v283 = vpop.f32.mrf.mxu0
  %284 = vmatprep.mubr.bf16.mxu0 %v38
  %285 = vmatmul.mubr.bf16.gmra.mxu0 %v37
  %v286 = vpop.f32.mrf.mxu0
  %v287 = vadd.f32 0.0, %v286
  %v288 = vpop.f32.mrf.mxu0
  %v289 = vpop.f32.mrf.mxu0
  %v290 = vadd.f32 0.0, %v289
  %v291 = vpop.f32.mrf.mxu0
  %292 = vmatprep.mubr.bf16.mxu0 %v40
  %293 = vmatmul.mubr.bf16.gmra.mxu0 %v39
  %v294 = vpop.f32.mrf.mxu0
  %v295 = vadd.f32 0.0, %v294
  %v296 = vpop.f32.mrf.mxu0
  %v297 = vpop.f32.mrf.mxu0
  %v298 = vadd.f32 0.0, %v297
  %v299 = vpop.f32.mrf.mxu0
  %300 = vmatprep.mubr.bf16.mxu0 %v42
  %301 = vmatmul.mubr.bf16.gmra.mxu0 %v41
  %v302 = vpop.f32.mrf.mxu0
  %v303 = vadd.f32 0.0, %v302
  %v304 = vpop.f32.mrf.mxu0
  %v305 = vpop.f32.mrf.mxu0
  %v306 = vadd.f32 0.0, %v305
  %v307 = vpop.f32.mrf.mxu0
  %308 = vmatprep.mubr.bf16.mxu0 %v44
  %309 = vmatmul.mubr.bf16.gmra.mxu0 %v43
  %v310 = vpop.f32.mrf.mxu0
  %v311 = vadd.f32 0.0, %v310
  %v312 = vpop.f32.mrf.mxu0
  %v313 = vpop.f32.mrf.mxu0
  %v314 = vadd.f32 0.0, %v313
  %v315 = vpop.f32.mrf.mxu0
  %316 = vmatprep.mubr.bf16.mxu0 %v46
  %317 = vmatmul.mubr.bf16.gmra.mxu0 %v45
  %v318 = vpop.f32.mrf.mxu0
  %v319 = vadd.f32 0.0, %v318
  %v320 = vpop.f32.mrf.mxu0
  %v321 = vpop.f32.mrf.mxu0
  %v322 = vadd.f32 0.0, %v321
  %v323 = vpop.f32.mrf.mxu0
  %324 = vmatprep.mubr.bf16.mxu0 %v48
  %325 = vmatmul.mubr.bf16.gmra.mxu0 %v47
  %v326 = vpop.f32.mrf.mxu0
  %v327 = vadd.f32 0.0, %v326
  %v328 = vpop.f32.mrf.mxu0
  %v329 = vpop.f32.mrf.mxu0
  %v330 = vadd.f32 0.0, %v329
  %v331 = vpop.f32.mrf.mxu0
  %332 = vmatprep.mubr.bf16.mxu0 %v50
  %333 = vmatmul.mubr.bf16.gmra.mxu0 %v49
  %v334 = vpop.f32.mrf.mxu0
  %v335 = vadd.f32 0.0, %v334
  %v336 = vpop.f32.mrf.mxu0
  %v337 = vpop.f32.mrf.mxu0
  %v338 = vadd.f32 0.0, %v337
  %v339 = vpop.f32.mrf.mxu0
  %340 = vmatprep.mubr.bf16.mxu0 %v52
  %341 = vmatmul.mubr.bf16.gmra.mxu0 %v51
  %v342 = vpop.f32.mrf.mxu0
  %v343 = vadd.f32 0.0, %v342
  %v344 = vpop.f32.mrf.mxu0
  %v345 = vpop.f32.mrf.mxu0
  %v346 = vadd.f32 0.0, %v345
  %v347 = vpop.f32.mrf.mxu0
  %348 = vmatprep.mubr.bf16.mxu0 %v54
  %349 = vmatmul.mubr.bf16.gmra.mxu0 %v53
  %v350 = vpop.f32.mrf.mxu0
  %v351 = vadd.f32 0.0, %v350
  %v352 = vpop.f32.mrf.mxu0
  %v353 = vpop.f32.mrf.mxu0
  %v354 = vadd.f32 0.0, %v353
  %v355 = vpop.f32.mrf.mxu0
  %356 = vmatprep.mubr.bf16.mxu0 %v56
  %357 = vmatmul.mubr.bf16.gmra.mxu0 %v55
  %v358 = vpop.f32.mrf.mxu0
  %v359 = vadd.f32 0.0, %v358
  %v360 = vpop.f32.mrf.mxu0
  %v361 = vpop.f32.mrf.mxu0
  %v362 = vadd.f32 0.0, %v361
  %v363 = vpop.f32.mrf.mxu0
  %364 = vmatprep.mubr.bf16.mxu0 %v58
  %365 = vmatmul.mubr.bf16.gmra.mxu0 %v57
  %v366 = vpop.f32.mrf.mxu0
  %v367 = vadd.f32 0.0, %v366
  %v368 = vpop.f32.mrf.mxu0
  %v369 = vpop.f32.mrf.mxu0
  %v370 = vadd.f32 0.0, %v369
  %v371 = vpop.f32.mrf.mxu0
  %372 = vmatprep.mubr.bf16.mxu0 %v60
  %373 = vmatmul.mubr.bf16.gmra.mxu0 %v59
  %v374 = vpop.f32.mrf.mxu0
  %v375 = vadd.f32 0.0, %v374
  %v376 = vpop.f32.mrf.mxu0
  %v377 = vpop.f32.mrf.mxu0
  %v378 = vadd.f32 0.0, %v377
  %v379 = vpop.f32.mrf.mxu0
  %380 = vmatprep.mubr.bf16.mxu0 %v62
  %381 = vmatmul.mubr.bf16.gmra.mxu0 %v61
  %v382 = vpop.f32.mrf.mxu0
  %v383 = vadd.f32 0.0, %v382
  %v384 = vpop.f32.mrf.mxu0
  %v385 = vpop.f32.mrf.mxu0
  %v386 = vadd.f32 0.0, %v385
  %v387 = vpop.f32.mrf.mxu0
  %388 = vdwg.mxu0
  %v389 = vld [vmem:[%s2] sm:$0xf]
  %v390 = vld [vmem:[%s2 + $0x4] sm:$0x3]
  %v391 = vld [vmem:[%s2 + $0x4] sm:$0xc]
  %v392 = vld [vmem:[%s2 + $0x8] sm:$0xf]
  %v393 = vpack.c.bf16 %v266, %v263
  %v394 = vpack.c.bf16 %v274, %v271
  %v395 = vpack.c.bf16 %v282, %v279
  %v396 = vpack.c.bf16 %v290, %v287
  %v397 = vpack.c.bf16 %v298, %v295
  %v398 = vpack.c.bf16 %v306, %v303
  %v399 = vpack.c.bf16 %v314, %v311
  %v400 = vpack.c.bf16 %v322, %v319
  %v401 = vpack.c.bf16 %v330, %v327
  %v402 = vpack.c.bf16 %v338, %v335
  %v403 = vpack.c.bf16 %v346, %v343
  %v404 = vpack.c.bf16 %v354, %v351
  %v405 = vpack.c.bf16 %v362, %v359
  %v406 = vpack.c.bf16 %v370, %v367
  %v407 = vpack.c.bf16 %v378, %v375
  %v408 = vpack.c.bf16 %v386, %v383
  %v411 = vunpack.c.l.b16 %v391
  %v412 = vunpack.c.l.b16 %v392
  %v413 = vpack.c.b16 %v412, %v411
  %v414 = vrot.slane %v413, 2
  %vm415 = vcmask 97280
  %v417 = vsel %vm415, %v393, 0
  %v420 = vsel %vm415, %v394, 0
  %v423 = vsel %vm415, %v395, 0
  %v426 = vsel %vm415, %v396, 0
  %v429 = vsel %vm415, %v397, 0
  %v432 = vsel %vm415, %v398, 0
  %v435 = vsel %vm415, %v399, 0
  %v438 = vsel %vm415, %v400, 0
  %v441 = vsel %vm415, %v401, 0
  %v444 = vsel %vm415, %v402, 0
  %v447 = vsel %vm415, %v403, 0
  %v450 = vsel %vm415, %v404, 0
  %v453 = vsel %vm415, %v405, 0
  %v456 = vsel %vm415, %v406, 0
  %v459 = vsel %vm415, %v407, 0
  %v462 = vsel %vm415, %v408, 0
  %vm464 = vcmask 1045504
  %v466 = vsel %vm464, %v414, 0
  %468 = vmatprep.subr.bf16.mxu0 0
  %469 = vmatpush1.bf16.msra.mxu0 0
  %470 = vmatprep.subr.bf16.mxu0 0
  %471 = vmatpush1.bf16.msra.mxu0 0
  %472 = vmatprep.subr.bf16.mxu0 0
  %473 = vmatpush1.bf16.msra.mxu0 0
  %474 = vmatprep.subr.bf16.mxu0 0
  %475 = vmatpush1.bf16.msra.mxu0 0
  %476 = vmatprep.subr.bf16.mxu0 0
  %477 = vmatpush1.bf16.msra.mxu0 0
  %478 = vmatprep.subr.bf16.mxu0 0
  %479 = vmatpush1.bf16.msra.mxu0 0
  %480 = vmatprep.subr.bf16.mxu0 0
  %481 = vmatpush1.bf16.msra.mxu0 0
  %482 = vmatprep.subr.bf16.mxu0 0
  %483 = vmatpush1.bf16.msra.mxu0 %v466
  %484 = vmatprep.subr.bf16.mxu0 0
  %485 = vmatpush2.bf16.msra.mxu0 0
  %486 = vmatprep.subr.bf16.mxu0 0
  %487 = vmatpush2.bf16.msra.mxu0 0
  %488 = vmatprep.subr.bf16.mxu0 0
  %489 = vmatpush2.bf16.msra.mxu0 0
  %490 = vmatprep.subr.bf16.mxu0 0
  %491 = vmatpush2.bf16.msra.mxu0 0
  %492 = vmatprep.subr.bf16.mxu0 0
  %493 = vmatpush2.bf16.msra.mxu0 0
  %494 = vmatprep.subr.bf16.mxu0 0
  %495 = vmatpush2.bf16.msra.mxu0 0
  %496 = vmatprep.subr.bf16.mxu0 0
  %497 = vmatpush2.bf16.msra.mxu0 0
  %498 = vmatprep.subr.bf16.mxu0 0
  %499 = vmatpush2.bf16.msra.mxu0 0
  %500 = vmatprep.mubr.bf16.mxu0 0
  %501 = vmatmul.mubr.bf16.gmra.mxu0 %v417
  %v502 = vpop.f32.mrf.mxu0
  %v503 = vadd.f32 0.0, %v502
  %v504 = vpop.f32.mrf.mxu0
  %v505 = vpop.f32.mrf.mxu0
  %v506 = vadd.f32 0.0, %v505
  %v507 = vpop.f32.mrf.mxu0
  %508 = vmatprep.mubr.bf16.mxu0 0
  %509 = vmatmul.mubr.bf16.gmra.mxu0 %v420
  %v510 = vpop.f32.mrf.mxu0
  %v511 = vadd.f32 0.0, %v510
  %v512 = vpop.f32.mrf.mxu0
  %v513 = vpop.f32.mrf.mxu0
  %v514 = vadd.f32 0.0, %v513
  %v515 = vpop.f32.mrf.mxu0
  %516 = vmatprep.mubr.bf16.mxu0 0
  %517 = vmatmul.mubr.bf16.gmra.mxu0 %v423
  %v518 = vpop.f32.mrf.mxu0
  %v519 = vadd.f32 0.0, %v518
  %v520 = vpop.f32.mrf.mxu0
  %v521 = vpop.f32.mrf.mxu0
  %v522 = vadd.f32 0.0, %v521
  %v523 = vpop.f32.mrf.mxu0
  %524 = vmatprep.mubr.bf16.mxu0 0
  %525 = vmatmul.mubr.bf16.gmra.mxu0 %v426
  %v526 = vpop.f32.mrf.mxu0
  %v527 = vadd.f32 0.0, %v526
  %v528 = vpop.f32.mrf.mxu0
  %v529 = vpop.f32.mrf.mxu0
  %v530 = vadd.f32 0.0, %v529
  %v531 = vpop.f32.mrf.mxu0
  %532 = vmatprep.mubr.bf16.mxu0 0
  %533 = vmatmul.mubr.bf16.gmra.mxu0 %v429
  %v534 = vpop.f32.mrf.mxu0
  %v535 = vadd.f32 0.0, %v534
  %v536 = vpop.f32.mrf.mxu0
  %v537 = vpop.f32.mrf.mxu0
  %v538 = vadd.f32 0.0, %v537
  %v539 = vpop.f32.mrf.mxu0
  %540 = vmatprep.mubr.bf16.mxu0 0
  %541 = vmatmul.mubr.bf16.gmra.mxu0 %v432
  %v542 = vpop.f32.mrf.mxu0
  %v543 = vadd.f32 0.0, %v542
  %v544 = vpop.f32.mrf.mxu0
  %v545 = vpop.f32.mrf.mxu0
  %v546 = vadd.f32 0.0, %v545
  %v547 = vpop.f32.mrf.mxu0
  %548 = vmatprep.mubr.bf16.mxu0 0
  %549 = vmatmul.mubr.bf16.gmra.mxu0 %v435
  %v550 = vpop.f32.mrf.mxu0
  %v551 = vadd.f32 0.0, %v550
  %v552 = vpop.f32.mrf.mxu0
  %v553 = vpop.f32.mrf.mxu0
  %v554 = vadd.f32 0.0, %v553
  %v555 = vpop.f32.mrf.mxu0
  %556 = vmatprep.mubr.bf16.mxu0 0
  %557 = vmatmul.mubr.bf16.gmra.mxu0 %v438
  %v558 = vpop.f32.mrf.mxu0
  %v559 = vadd.f32 0.0, %v558
  %v560 = vpop.f32.mrf.mxu0
  %v561 = vpop.f32.mrf.mxu0
  %v562 = vadd.f32 0.0, %v561
  %v563 = vpop.f32.mrf.mxu0
  %564 = vmatprep.mubr.bf16.mxu0 0
  %565 = vmatmul.mubr.bf16.gmra.mxu0 %v441
  %v566 = vpop.f32.mrf.mxu0
  %v567 = vadd.f32 0.0, %v566
  %v568 = vpop.f32.mrf.mxu0
  %v569 = vpop.f32.mrf.mxu0
  %v570 = vadd.f32 0.0, %v569
  %v571 = vpop.f32.mrf.mxu0
  %572 = vmatprep.mubr.bf16.mxu0 0
  %573 = vmatmul.mubr.bf16.gmra.mxu0 %v444
  %v574 = vpop.f32.mrf.mxu0
  %v575 = vadd.f32 0.0, %v574
  %v576 = vpop.f32.mrf.mxu0
  %v577 = vpop.f32.mrf.mxu0
  %v578 = vadd.f32 0.0, %v577
  %v579 = vpop.f32.mrf.mxu0
  %580 = vmatprep.mubr.bf16.mxu0 0
  %581 = vmatmul.mubr.bf16.gmra.mxu0 %v447
  %v582 = vpop.f32.mrf.mxu0
  %v583 = vadd.f32 0.0, %v582
  %v584 = vpop.f32.mrf.mxu0
  %v585 = vpop.f32.mrf.mxu0
  %v586 = vadd.f32 0.0, %v585
  %v587 = vpop.f32.mrf.mxu0
  %588 = vmatprep.mubr.bf16.mxu0 0
  %589 = vmatmul.mubr.bf16.gmra.mxu0 %v450
  %v590 = vpop.f32.mrf.mxu0
  %v591 = vadd.f32 0.0, %v590
  %v592 = vpop.f32.mrf.mxu0
  %v593 = vpop.f32.mrf.mxu0
  %v594 = vadd.f32 0.0, %v593
  %v595 = vpop.f32.mrf.mxu0
  %596 = vmatprep.mubr.bf16.mxu0 0
  %597 = vmatmul.mubr.bf16.gmra.mxu0 %v453
  %v598 = vpop.f32.mrf.mxu0
  %v599 = vadd.f32 0.0, %v598
  %v600 = vpop.f32.mrf.mxu0
  %v601 = vpop.f32.mrf.mxu0
  %v602 = vadd.f32 0.0, %v601
  %v603 = vpop.f32.mrf.mxu0
  %604 = vmatprep.mubr.bf16.mxu0 0
  %605 = vmatmul.mubr.bf16.gmra.mxu0 %v456
  %v606 = vpop.f32.mrf.mxu0
  %v607 = vadd.f32 0.0, %v606
  %v608 = vpop.f32.mrf.mxu0
  %v609 = vpop.f32.mrf.mxu0
  %v610 = vadd.f32 0.0, %v609
  %v611 = vpop.f32.mrf.mxu0
  %612 = vmatprep.mubr.bf16.mxu0 0
  %613 = vmatmul.mubr.bf16.gmra.mxu0 %v459
  %v614 = vpop.f32.mrf.mxu0
  %v615 = vadd.f32 0.0, %v614
  %v616 = vpop.f32.mrf.mxu0
  %v617 = vpop.f32.mrf.mxu0
  %v618 = vadd.f32 0.0, %v617
  %v619 = vpop.f32.mrf.mxu0
  %620 = vmatprep.mubr.bf16.mxu0 0
  %621 = vmatmul.mubr.bf16.gmra.mxu0 %v462
  %v622 = vpop.f32.mrf.mxu0
  %v623 = vadd.f32 0.0, %v622
  %v624 = vpop.f32.mrf.mxu0
  %v625 = vpop.f32.mrf.mxu0
  %v626 = vadd.f32 0.0, %v625
  %v627 = vpop.f32.mrf.mxu0
  %628 = vdwg.mxu0
  %v661 = vunpack.c.l.b16 %v100
  %v662 = vunpack.c.l.b16 %v101
  %v663 = vunpack.c.l.b16 %v102
  %v664 = vunpack.c.l.b16 %v103
  %v665 = vunpack.c.l.b16 %v104
  %v666 = vunpack.c.l.b16 %v105
  %v667 = vunpack.c.l.b16 %v106
  %v668 = vunpack.c.l.b16 %v107
  %v669 = vunpack.c.l.b16 %v108
  %v670 = vunpack.c.l.b16 %v109
  %v671 = vunpack.c.l.b16 %v110
  %v672 = vunpack.c.l.b16 %v111
  %v673 = vunpack.c.l.b16 %v112
  %v674 = vunpack.c.l.b16 %v113
  %v675 = vunpack.c.l.b16 %v114
  %v676 = vunpack.c.l.b16 %v115
  %v677 = vunpack.c.l.b16 %v116
  %v678 = vunpack.c.l.b16 %v117
  %v679 = vunpack.c.l.b16 %v118
  %v680 = vunpack.c.l.b16 %v119
  %v681 = vunpack.c.l.b16 %v120
  %v682 = vunpack.c.l.b16 %v121
  %v683 = vunpack.c.l.b16 %v122
  %v684 = vunpack.c.l.b16 %v123
  %v685 = vunpack.c.l.b16 %v124
  %v686 = vunpack.c.l.b16 %v125
  %v687 = vunpack.c.l.b16 %v126
  %v688 = vunpack.c.l.b16 %v127
  %v689 = vunpack.c.l.b16 %v128
  %v690 = vunpack.c.l.b16 %v129
  %v691 = vunpack.c.l.b16 %v130
  %v692 = vunpack.c.l.b16 %v131
  %v693 = vpack.c.b16 %v662, %v661
  %v694 = vpack.c.b16 %v664, %v663
  %v695 = vpack.c.b16 %v666, %v665
  %v696 = vpack.c.b16 %v668, %v667
  %v697 = vpack.c.b16 %v670, %v669
  %v698 = vpack.c.b16 %v672, %v671
  %v699 = vpack.c.b16 %v674, %v673
  %v700 = vpack.c.b16 %v676, %v675
  %v701 = vpack.c.b16 %v678, %v677
  %v702 = vpack.c.b16 %v680, %v679
  %v703 = vpack.c.b16 %v682, %v681
  %v704 = vpack.c.b16 %v684, %v683
  %v705 = vpack.c.b16 %v686, %v685
  %v706 = vpack.c.b16 %v688, %v687
  %v707 = vpack.c.b16 %v690, %v689
  %v708 = vpack.c.b16 %v692, %v691
  %v711 = vunpack.c.l.b16 %v389
  %v712 = vunpack.c.l.b16 %v390
  %v713 = vpack.c.b16 %v712, %v711
  %v715 = vsel %vm415, %v693, 0
  %v718 = vsel %vm415, %v694, 0
  %v721 = vsel %vm415, %v695, 0
  %v724 = vsel %vm415, %v696, 0
  %v727 = vsel %vm415, %v697, 0
  %v730 = vsel %vm415, %v698, 0
  %v733 = vsel %vm415, %v699, 0
  %v736 = vsel %vm415, %v700, 0
  %v739 = vsel %vm415, %v701, 0
  %v742 = vsel %vm415, %v702, 0
  %v745 = vsel %vm415, %v703, 0
  %v748 = vsel %vm415, %v704, 0
  %v751 = vsel %vm415, %v705, 0
  %v754 = vsel %vm415, %v706, 0
  %v757 = vsel %vm415, %v707, 0
  %v760 = vsel %vm415, %v708, 0
  %v763 = vsel %vm464, %v713, 0
  %765 = vmatprep.subr.bf16.mxu0 0
  %766 = vmatpush1.bf16.msra.mxu0 0
  %767 = vmatprep.subr.bf16.mxu0 0
  %768 = vmatpush1.bf16.msra.mxu0 0
  %769 = vmatprep.subr.bf16.mxu0 0
  %770 = vmatpush1.bf16.msra.mxu0 0
  %771 = vmatprep.subr.bf16.mxu0 0
  %772 = vmatpush1.bf16.msra.mxu0 0
  %773 = vmatprep.subr.bf16.mxu0 0
  %774 = vmatpush1.bf16.msra.mxu0 0
  %775 = vmatprep.subr.bf16.mxu0 0
  %776 = vmatpush1.bf16.msra.mxu0 0
  %777 = vmatprep.subr.bf16.mxu0 0
  %778 = vmatpush1.bf16.msra.mxu0 0
  %779 = vmatprep.subr.bf16.mxu0 0
  %780 = vmatpush1.bf16.msra.mxu0 %v763
  %781 = vmatprep.subr.bf16.mxu0 0
  %782 = vmatpush2.bf16.msra.mxu0 0
  %783 = vmatprep.subr.bf16.mxu0 0
  %784 = vmatpush2.bf16.msra.mxu0 0
  %785 = vmatprep.subr.bf16.mxu0 0
  %786 = vmatpush2.bf16.msra.mxu0 0
  %787 = vmatprep.subr.bf16.mxu0 0
  %788 = vmatpush2.bf16.msra.mxu0 0
  %789 = vmatprep.subr.bf16.mxu0 0
  %790 = vmatpush2.bf16.msra.mxu0 0
  %791 = vmatprep.subr.bf16.mxu0 0
  %792 = vmatpush2.bf16.msra.mxu0 0
  %793 = vmatprep.subr.bf16.mxu0 0
  %794 = vmatpush2.bf16.msra.mxu0 0
  %795 = vmatprep.subr.bf16.mxu0 0
  %796 = vmatpush2.bf16.msra.mxu0 0
  %797 = vmatprep.mubr.bf16.mxu0 0
  %798 = vmatmul.mubr.bf16.gmra.mxu0 %v715
  %v799 = vpop.f32.mrf.mxu0
  %v800 = vadd.f32 %v503, %v799
  %v801 = vpop.f32.mrf.mxu0
  %v802 = vpop.f32.mrf.mxu0
  %v803 = vadd.f32 %v506, %v802
  %v804 = vpop.f32.mrf.mxu0
  %805 = vmatprep.mubr.bf16.mxu0 0
  %806 = vmatmul.mubr.bf16.gmra.mxu0 %v718
  %v807 = vpop.f32.mrf.mxu0
  %v808 = vadd.f32 %v511, %v807
  %v809 = vpop.f32.mrf.mxu0
  %v810 = vpop.f32.mrf.mxu0
  %v811 = vadd.f32 %v514, %v810
  %v812 = vpop.f32.mrf.mxu0
  %813 = vmatprep.mubr.bf16.mxu0 0
  %814 = vmatmul.mubr.bf16.gmra.mxu0 %v721
  %v815 = vpop.f32.mrf.mxu0
  %v816 = vadd.f32 %v519, %v815
  %v817 = vpop.f32.mrf.mxu0
  %v818 = vpop.f32.mrf.mxu0
  %v819 = vadd.f32 %v522, %v818
  %v820 = vpop.f32.mrf.mxu0
  %821 = vmatprep.mubr.bf16.mxu0 0
  %822 = vmatmul.mubr.bf16.gmra.mxu0 %v724
  %v823 = vpop.f32.mrf.mxu0
  %v824 = vadd.f32 %v527, %v823
  %v825 = vpop.f32.mrf.mxu0
  %v826 = vpop.f32.mrf.mxu0
  %v827 = vadd.f32 %v530, %v826
  %v828 = vpop.f32.mrf.mxu0
  %829 = vmatprep.mubr.bf16.mxu0 0
  %830 = vmatmul.mubr.bf16.gmra.mxu0 %v727
  %v831 = vpop.f32.mrf.mxu0
  %v832 = vadd.f32 %v535, %v831
  %v833 = vpop.f32.mrf.mxu0
  %v834 = vpop.f32.mrf.mxu0
  %v835 = vadd.f32 %v538, %v834
  %v836 = vpop.f32.mrf.mxu0
  %837 = vmatprep.mubr.bf16.mxu0 0
  %838 = vmatmul.mubr.bf16.gmra.mxu0 %v730
  %v839 = vpop.f32.mrf.mxu0
  %v840 = vadd.f32 %v543, %v839
  %v841 = vpop.f32.mrf.mxu0
  %v842 = vpop.f32.mrf.mxu0
  %v843 = vadd.f32 %v546, %v842
  %v844 = vpop.f32.mrf.mxu0
  %845 = vmatprep.mubr.bf16.mxu0 0
  %846 = vmatmul.mubr.bf16.gmra.mxu0 %v733
  %v847 = vpop.f32.mrf.mxu0
  %v848 = vadd.f32 %v551, %v847
  %v849 = vpop.f32.mrf.mxu0
  %v850 = vpop.f32.mrf.mxu0
  %v851 = vadd.f32 %v554, %v850
  %v852 = vpop.f32.mrf.mxu0
  %853 = vmatprep.mubr.bf16.mxu0 0
  %854 = vmatmul.mubr.bf16.gmra.mxu0 %v736
  %v855 = vpop.f32.mrf.mxu0
  %v856 = vadd.f32 %v559, %v855
  %v857 = vpop.f32.mrf.mxu0
  %v858 = vpop.f32.mrf.mxu0
  %v859 = vadd.f32 %v562, %v858
  %v860 = vpop.f32.mrf.mxu0
  %861 = vmatprep.mubr.bf16.mxu0 0
  %862 = vmatmul.mubr.bf16.gmra.mxu0 %v739
  %v863 = vpop.f32.mrf.mxu0
  %v864 = vadd.f32 %v567, %v863
  %v865 = vpop.f32.mrf.mxu0
  %v866 = vpop.f32.mrf.mxu0
  %v867 = vadd.f32 %v570, %v866
  %v868 = vpop.f32.mrf.mxu0
  %869 = vmatprep.mubr.bf16.mxu0 0
  %870 = vmatmul.mubr.bf16.gmra.mxu0 %v742
  %v871 = vpop.f32.mrf.mxu0
  %v872 = vadd.f32 %v575, %v871
  %v873 = vpop.f32.mrf.mxu0
  %v874 = vpop.f32.mrf.mxu0
  %v875 = vadd.f32 %v578, %v874
  %v876 = vpop.f32.mrf.mxu0
  %877 = vmatprep.mubr.bf16.mxu0 0
  %878 = vmatmul.mubr.bf16.gmra.mxu0 %v745
  %v879 = vpop.f32.mrf.mxu0
  %v880 = vadd.f32 %v583, %v879
  %v881 = vpop.f32.mrf.mxu0
  %v882 = vpop.f32.mrf.mxu0
  %v883 = vadd.f32 %v586, %v882
  %v884 = vpop.f32.mrf.mxu0
  %885 = vmatprep.mubr.bf16.mxu0 0
  %886 = vmatmul.mubr.bf16.gmra.mxu0 %v748
  %v887 = vpop.f32.mrf.mxu0
  %v888 = vadd.f32 %v591, %v887
  %v889 = vpop.f32.mrf.mxu0
  %v890 = vpop.f32.mrf.mxu0
  %v891 = vadd.f32 %v594, %v890
  %v892 = vpop.f32.mrf.mxu0
  %893 = vmatprep.mubr.bf16.mxu0 0
  %894 = vmatmul.mubr.bf16.gmra.mxu0 %v751
  %v895 = vpop.f32.mrf.mxu0
  %v896 = vadd.f32 %v599, %v895
  %v897 = vpop.f32.mrf.mxu0
  %v898 = vpop.f32.mrf.mxu0
  %v899 = vadd.f32 %v602, %v898
  %v900 = vpop.f32.mrf.mxu0
  %901 = vmatprep.mubr.bf16.mxu0 0
  %902 = vmatmul.mubr.bf16.gmra.mxu0 %v754
  %v903 = vpop.f32.mrf.mxu0
  %v904 = vadd.f32 %v607, %v903
  %v905 = vpop.f32.mrf.mxu0
  %v906 = vpop.f32.mrf.mxu0
  %v907 = vadd.f32 %v610, %v906
  %v908 = vpop.f32.mrf.mxu0
  %909 = vmatprep.mubr.bf16.mxu0 0
  %910 = vmatmul.mubr.bf16.gmra.mxu0 %v757
  %v911 = vpop.f32.mrf.mxu0
  %v912 = vadd.f32 %v615, %v911
  %v913 = vpop.f32.mrf.mxu0
  %v914 = vpop.f32.mrf.mxu0
  %v915 = vadd.f32 %v618, %v914
  %v916 = vpop.f32.mrf.mxu0
  %917 = vmatprep.mubr.bf16.mxu0 0
  %918 = vmatmul.mubr.bf16.gmra.mxu0 %v760
  %v919 = vpop.f32.mrf.mxu0
  %v920 = vadd.f32 %v623, %v919
  %v921 = vpop.f32.mrf.mxu0
  %v922 = vpop.f32.mrf.mxu0
  %v923 = vadd.f32 %v626, %v922
  %v924 = vpop.f32.mrf.mxu0
  %925 = vdwg.mxu0
  %v926 = vmax.f32 %v800, 0.0
  %v927 = vmax.f32 %v803, 0.0
  %v928 = vmax.f32 %v808, 0.0
  %v929 = vmax.f32 %v811, 0.0
  %v930 = vmax.f32 %v816, 0.0
  %v931 = vmax.f32 %v819, 0.0
  %v932 = vmax.f32 %v824, 0.0
  %v933 = vmax.f32 %v827, 0.0
  %v934 = vmax.f32 %v832, 0.0
  %v935 = vmax.f32 %v835, 0.0
  %v936 = vmax.f32 %v840, 0.0
  %v937 = vmax.f32 %v843, 0.0
  %v938 = vmax.f32 %v848, 0.0
  %v939 = vmax.f32 %v851, 0.0
  %v940 = vmax.f32 %v856, 0.0
  %v941 = vmax.f32 %v859, 0.0
  %v942 = vmax.f32 %v864, 0.0
  %v943 = vmax.f32 %v867, 0.0
  %v944 = vmax.f32 %v872, 0.0
  %v945 = vmax.f32 %v875, 0.0
  %v946 = vmax.f32 %v880, 0.0
  %v947 = vmax.f32 %v883, 0.0
  %v948 = vmax.f32 %v888, 0.0
  %v949 = vmax.f32 %v891, 0.0
  %v950 = vmax.f32 %v896, 0.0
  %v951 = vmax.f32 %v899, 0.0
  %v952 = vmax.f32 %v904, 0.0
  %v953 = vmax.f32 %v907, 0.0
  %v954 = vmax.f32 %v912, 0.0
  %v955 = vmax.f32 %v915, 0.0
  %v956 = vmax.f32 %v920, 0.0
  %v957 = vmax.f32 %v923, 0.0
  %v958 = vpack.c.bf16 %v927, %v926
  %v959 = vpack.c.bf16 %v929, %v928
  %v960 = vpack.c.bf16 %v931, %v930
  %v961 = vpack.c.bf16 %v933, %v932
  %v962 = vpack.c.bf16 %v935, %v934
  %v963 = vpack.c.bf16 %v937, %v936
  %v964 = vpack.c.bf16 %v939, %v938
  %v965 = vpack.c.bf16 %v941, %v940
  %v966 = vpack.c.bf16 %v943, %v942
  %v967 = vpack.c.bf16 %v945, %v944
  %v968 = vpack.c.bf16 %v947, %v946
  %v969 = vpack.c.bf16 %v949, %v948
  %v970 = vpack.c.bf16 %v951, %v950
  %v971 = vpack.c.bf16 %v953, %v952
  %v972 = vpack.c.bf16 %v955, %v954
  %v973 = vpack.c.bf16 %v957, %v956
  %v990 = vunpack.c.l.b16 %v958
  %v991 = vunpack.c.h.b16 %v958
  %v992 = vunpack.c.l.b16 %v959
  %v993 = vunpack.c.h.b16 %v959
  %v994 = vunpack.c.l.b16 %v960
  %v995 = vunpack.c.h.b16 %v960
  %v996 = vunpack.c.l.b16 %v961
  %v997 = vunpack.c.h.b16 %v961
  %v998 = vunpack.c.l.b16 %v962
  %v999 = vunpack.c.h.b16 %v962
  %v1000 = vunpack.c.l.b16 %v963
  %v1001 = vunpack.c.h.b16 %v963
  %v1002 = vunpack.c.l.b16 %v964
  %v1003 = vunpack.c.h.b16 %v964
  %v1004 = vunpack.c.l.b16 %v965
  %v1005 = vunpack.c.h.b16 %v965
  %v1006 = vunpack.c.l.b16 %v966
  %v1007 = vunpack.c.h.b16 %v966
  %v1008 = vunpack.c.l.b16 %v967
  %v1009 = vunpack.c.h.b16 %v967
  %v1010 = vunpack.c.l.b16 %v968
  %v1011 = vunpack.c.h.b16 %v968
  %v1012 = vunpack.c.l.b16 %v969
  %v1013 = vunpack.c.h.b16 %v969
  %v1014 = vunpack.c.l.b16 %v970
  %v1015 = vunpack.c.h.b16 %v970
  %v1016 = vunpack.c.l.b16 %v971
  %v1017 = vunpack.c.h.b16 %v971
  %v1018 = vunpack.c.l.b16 %v972
  %v1019 = vunpack.c.h.b16 %v972
  %v1020 = vunpack.c.l.b16 %v973
  %v1021 = vunpack.c.h.b16 %v973
  %v1022 = vpack.c.b16 %v990, %v990
  %v1023 = vpack.c.b16 %v991, %v991
  %v1024 = vpack.c.b16 %v992, %v992
  %v1025 = vpack.c.b16 %v993, %v993
  %v1026 = vpack.c.b16 %v994, %v994
  %v1027 = vpack.c.b16 %v995, %v995
  %v1028 = vpack.c.b16 %v996, %v996
  %v1029 = vpack.c.b16 %v997, %v997
  %v1030 = vpack.c.b16 %v998, %v998
  %v1031 = vpack.c.b16 %v999, %v999
  %v1032 = vpack.c.b16 %v1000, %v1000
  %v1033 = vpack.c.b16 %v1001, %v1001
  %v1034 = vpack.c.b16 %v1002, %v1002
  %v1035 = vpack.c.b16 %v1003, %v1003
  %v1036 = vpack.c.b16 %v1004, %v1004
  %v1037 = vpack.c.b16 %v1005, %v1005
  %v1038 = vpack.c.b16 %v1006, %v1006
  %v1039 = vpack.c.b16 %v1007, %v1007
  %v1040 = vpack.c.b16 %v1008, %v1008
  %v1041 = vpack.c.b16 %v1009, %v1009
  %v1042 = vpack.c.b16 %v1010, %v1010
  %v1043 = vpack.c.b16 %v1011, %v1011
  %v1044 = vpack.c.b16 %v1012, %v1012
  %v1045 = vpack.c.b16 %v1013, %v1013
  %v1046 = vpack.c.b16 %v1014, %v1014
  %v1047 = vpack.c.b16 %v1015, %v1015
  %v1048 = vpack.c.b16 %v1016, %v1016
  %v1049 = vpack.c.b16 %v1017, %v1017
  %v1050 = vpack.c.b16 %v1018, %v1018
  %v1051 = vpack.c.b16 %v1019, %v1019
  %v1052 = vpack.c.b16 %v1020, %v1020
  %v1053 = vpack.c.b16 %v1021, %v1021
  %vm1086 = vcmask 158720
  %1087 = vst.msk [vmem:[%s3] sm:$0xf] %vm1086, %v1022
  %1088 = vst.msk [vmem:[%s3 + $0x4] sm:$0xf] %vm1086, %v1023
  %1089 = vst.msk [vmem:[%s3 + $0x8] sm:$0xf] %vm1086, %v1024
  %1090 = vst.msk [vmem:[%s3 + $0xc] sm:$0xf] %vm1086, %v1025
  %1091 = vst.msk [vmem:[%s3 + $0x10] sm:$0xf] %vm1086, %v1026
  %1092 = vst.msk [vmem:[%s3 + $0x14] sm:$0xf] %vm1086, %v1027
  %1093 = vst.msk [vmem:[%s3 + $0x18] sm:$0xf] %vm1086, %v1028
  %1094 = vst.msk [vmem:[%s3 + $0x1c] sm:$0xf] %vm1086, %v1029
  %1095 = vst.msk [vmem:[%s3 + $0x20] sm:$0xf] %vm1086, %v1030
  %1096 = vst.msk [vmem:[%s3 + $0x24] sm:$0xf] %vm1086, %v1031
  %1097 = vst.msk [vmem:[%s3 + $0x28] sm:$0xf] %vm1086, %v1032
  %1098 = vst.msk [vmem:[%s3 + $0x2c] sm:$0xf] %vm1086, %v1033
  %1099 = vst.msk [vmem:[%s3 + $0x30] sm:$0xf] %vm1086, %v1034
  %1100 = vst.msk [vmem:[%s3 + $0x34] sm:$0xf] %vm1086, %v1035
  %1101 = vst.msk [vmem:[%s3 + $0x38] sm:$0xf] %vm1086, %v1036
  %1102 = vst.msk [vmem:[%s3 + $0x3c] sm:$0xf] %vm1086, %v1037
  %1103 = vst.msk [vmem:[%s3 + $0x40] sm:$0xf] %vm1086, %v1038
  %1104 = vst.msk [vmem:[%s3 + $0x44] sm:$0xf] %vm1086, %v1039
  %1105 = vst.msk [vmem:[%s3 + $0x48] sm:$0xf] %vm1086, %v1040
  %1106 = vst.msk [vmem:[%s3 + $0x4c] sm:$0xf] %vm1086, %v1041
  %1107 = vst.msk [vmem:[%s3 + $0x50] sm:$0xf] %vm1086, %v1042
  %1108 = vst.msk [vmem:[%s3 + $0x54] sm:$0xf] %vm1086, %v1043
  %1109 = vst.msk [vmem:[%s3 + $0x58] sm:$0xf] %vm1086, %v1044
  %1110 = vst.msk [vmem:[%s3 + $0x5c] sm:$0xf] %vm1086, %v1045
  %1111 = vst.msk [vmem:[%s3 + $0x60] sm:$0xf] %vm1086, %v1046
  %1112 = vst.msk [vmem:[%s3 + $0x64] sm:$0xf] %vm1086, %v1047
  %1113 = vst.msk [vmem:[%s3 + $0x68] sm:$0xf] %vm1086, %v1048
  %1114 = vst.msk [vmem:[%s3 + $0x6c] sm:$0xf] %vm1086, %v1049
  %1115 = vst.msk [vmem:[%s3 + $0x70] sm:$0xf] %vm1086, %v1050
  %1116 = vst.msk [vmem:[%s3 + $0x74] sm:$0xf] %vm1086, %v1051
  %1117 = vst.msk [vmem:[%s3 + $0x78] sm:$0xf] %vm1086, %v1052
  %1118 = vst.msk [vmem:[%s3 + $0x7c] sm:$0xf] %vm1086, %v1053
  // Predicated region
  $region14: #{tpu_custom_call.1} parent=0 // pred_check
    _
  $region15: #{tpu_custom_call.1} parent=0 // pred_check_branch
    %1120 = sbr.rel (0) target = $region17
  $region16: #{tpu_custom_call.1} parent=0 // pred_region
    _
  $region17: #{tpu_custom_call.1} parent=0 // pred_fallthru
    _
  // Predicated region
  $region18: #{tpu_custom_call.1} parent=0 // pred_check
    _
  $region19: #{tpu_custom_call.1} parent=0 // pred_check_branch
    %1122 = sbr.rel (0) target = $region21
  $region20: #{tpu_custom_call.1} parent=0 // pred_region
    _
  $region21: #{tpu_custom_call.1} parent=0 // pred_fallthru
    _

</llo_original>
